<compile_context>
chip_gen: v7x
topology: tpu7x:2x2x1
jax: 0.10.0
libtpu: 0.0.40
codegen_flags: <defaults>
</compile_context>

<pallas_src>
import jax
import jax.numpy as jnp
from jax.experimental import pallas as pl
from jax.experimental.pallas import tpu as pltpu


def _round_up(x, m):
    return ((x + m - 1) // m) * m


# ---------------------------------------------------------------------------
# Kernel: one MXU matmul per row tile against the fused 4-branch weight,
# epilogue = +shift (conv bias & BN already folded in) -> ReLU.
# ---------------------------------------------------------------------------
def _cblock_kernel(p_ref, w_ref, s_ref, o_ref):
    """p_ref: (TILE_M, K_pad)   im2col 9x9 patches (compute dtype)
       w_ref: (K_pad, Cout_pad) fused/scaled weights (compute dtype)
       s_ref: (1, Cout_pad)     fused bias/BN shift (f32)
       o_ref: (TILE_M, Cout_pad) f32 output
    """
    y = jnp.dot(p_ref[...], w_ref[...], preferred_element_type=jnp.float32)
    y = y + s_ref[...]
    o_ref[...] = jnp.maximum(y, 0.0).astype(o_ref.dtype)


# ---------------------------------------------------------------------------
# Wrapper helpers
# ---------------------------------------------------------------------------
def _im2col9(x_nhwc):
    """9x9 'same' patches. Returns (N*H*W, 81*C), columns ordered (dy, dx, c)."""
    N, H, W, C = x_nhwc.shape
    p = 4
    xp = jnp.pad(x_nhwc, ((0, 0), (p, p), (p, p), (0, 0)))
    patches = jnp.stack(
        [xp[:, dy:dy + H, dx:dx + W, :] for dy in range(9) for dx in range(9)],
        axis=3,
    )  # (N, H, W, 81, C)
    return patches.reshape(N * H * W, 81 * C)


def _build_fused_weight_shift(params, eps):
    """Stack the 4 branch convs into one (81*Cin, Cout) matmul weight with the
    conv bias and eval-mode BN folded in. Returns (w_mat, shift)."""
    Cout = params["gamma"].shape[0]
    C4 = Cout // 4
    Cin = params["w3"].shape[1]

    ws, bs = [], []
    for k in (3, 5, 7, 9):
        w = params[f"w{k}"]                         # (C4, Cin, k, k)
        off = (9 - k) // 2
        w9 = jnp.zeros((C4, Cin, 9, 9), jnp.float32)
        w9 = w9.at[:, :, off:off + k, off:off + k].set(w)   # center-embed
        ws.append(w9)
        bs.append(params[f"b{k}"])
    w_all = jnp.concatenate(ws, axis=0)             # (Cout, Cin, 9, 9)
    b_all = jnp.concatenate(bs, axis=0)             # (Cout,)

    # Match im2col column order (dy, dx, cin): (Cout,Cin,9,9)->(9,9,Cin,Cout)
    w_mat = jnp.transpose(w_all, (2, 3, 1, 0)).reshape(81 * Cin, Cout)

    scale = params["gamma"] / jnp.sqrt(params["running_var"] + eps)
    shift = (b_all - params["running_mean"]) * scale + params["beta"]
    w_mat = w_mat * scale[None, :]                  # fold BN scale into weight
    return w_mat, shift


def _choose_tile_m(M, K_pad, Cout_pad, patch_bytes, budget_bytes=12 << 20):
    """Biggest row tile whose double-buffered patch+output slabs fit budget."""
    per_row = patch_bytes * K_pad + 4 * Cout_pad
    tile = budget_bytes // (2 * per_row)
    tile = min(tile, 1024)
    tile = min(tile, _round_up(M, 8))
    tile = max(8, (tile // 8) * 8)
    return int(tile)


def cblock_forward(x_nchw, params, eps=1e-5, compute_dtype=jnp.float32):
    """x_nchw: (N, Cin, H, W) float32. Returns (N, Cout, H, W) float32."""
    N, Cin, H, W = x_nchw.shape
    Cout = params["gamma"].shape[0]
    M = N * H * W
    K = 81 * Cin

    # ---- wrapper-side data prep (layout plumbing, runs as plain XLA) ----
    x_nhwc = jnp.transpose(x_nchw, (0, 2, 3, 1))
    patches = _im2col9(x_nhwc)                       # (M, 81*Cin)
    w_mat, shift = _build_fused_weight_shift(params, eps)

    # Pad K and Cout to lane-friendly multiples of 128 (exact: zero pad).
    K_pad = _round_up(K, 128)
    Cout_pad = _round_up(Cout, 128)

    patch_bytes = jnp.dtype(compute_dtype).itemsize
    TILE_M = _choose_tile_m(M, K_pad, Cout_pad, patch_bytes)
    M_pad = _round_up(M, TILE_M)
    num_tiles = M_pad // TILE_M

    patches = jnp.pad(patches, ((0, M_pad - M), (0, K_pad - K)))
    w_mat = jnp.pad(w_mat, ((0, K_pad - K), (0, Cout_pad - Cout)))
    shift = jnp.pad(shift, (0, Cout_pad - Cout)).reshape(1, Cout_pad)

    patches = patches.astype(compute_dtype)
    w_mat = w_mat.astype(compute_dtype)
    shift = shift.astype(jnp.float32)

    # Explicit VMEM ceiling (double-buffered tiles + resident weight + slack).
    vmem_bytes = (2 * TILE_M * (patch_bytes * K_pad + 4 * Cout_pad)
                  + 2 * patch_bytes * K_pad * Cout_pad
                  + (4 << 20))
    vmem_bytes = min(max(vmem_bytes, 16 << 20), 32 << 20)

    cost = pl.CostEstimate(
        flops=2 * M_pad * K_pad * Cout_pad,
        transcendentals=0,
        bytes_accessed=(patch_bytes * (M_pad * K_pad + K_pad * Cout_pad)
                        + 4 * (M_pad * Cout_pad + Cout_pad)),
    )

    out = pl.pallas_call(
        _cblock_kernel,
        out_shape=jax.ShapeDtypeStruct((M_pad, Cout_pad), jnp.float32),
        grid=(num_tiles,),
        in_specs=[
            pl.BlockSpec((TILE_M, K_pad), lambda i: (i, 0)),
            pl.BlockSpec((K_pad, Cout_pad), lambda i: (0, 0)),
            pl.BlockSpec((1, Cout_pad), lambda i: (0, 0)),
        ],
        out_specs=pl.BlockSpec((TILE_M, Cout_pad), lambda i: (i, 0)),
        compiler_params=pltpu.CompilerParams(
            dimension_semantics=("parallel",),
            vmem_limit_bytes=int(vmem_bytes),
        ),
        cost_estimate=cost,
    )(patches, w_mat, shift)

    out = out[:M, :Cout].reshape(N, H, W, Cout)
    return jnp.transpose(out, (0, 3, 1, 2))


# ---------------------------------------------------------------------------
# Parameter init + pure-JAX reference (PyTorch eval-mode semantics)
# ---------------------------------------------------------------------------
def _init_params(key, in_channels, out_channels):
    assert out_channels % 4 == 0
    c4 = out_channels // 4
    params = {}
    keys = jax.random.split(key, 12)
    for i, k in enumerate((3, 5, 7, 9)):
        fan_in = in_channels * k * k
        bound = 1.0 / (fan_in ** 0.5)
        params[f"w{k}"] = jax.random.uniform(
            keys[2 * i], (c4, in_channels, k, k), jnp.float32, -bound, bound)
        params[f"b{k}"] = jax.random.uniform(
            keys[2 * i + 1], (c4,), jnp.float32, -bound, bound)
    params["gamma"] = jax.random.uniform(keys[8], (out_channels,), jnp.float32, 0.5, 1.5)
    params["beta"] = jax.random.uniform(keys[9], (out_channels,), jnp.float32, -0.5, 0.5)
    params["running_mean"] = jax.random.uniform(
        keys[10], (out_channels,), jnp.float32, -0.5, 0.5)
    params["running_var"] = jax.random.uniform(
        keys[11], (out_channels,), jnp.float32, 0.5, 1.5)
    return params


def _reference(x_nchw, params, eps=1e-5):
    outs = []
    for k in (3, 5, 7, 9):
        y = jax.lax.conv_general_dilated(
            x_nchw, params[f"w{k}"], (1, 1), [(k // 2, k // 2)] * 2,
            dimension_numbers=("NCHW", "OIHW", "NCHW"))
        outs.append(y + params[f"b{k}"][None, :, None, None])
    y = jnp.concatenate(outs, axis=1)
    scale = params["gamma"] / jnp.sqrt(params["running_var"] + eps)
    shift = params["beta"] - params["running_mean"] * scale
    y = y * scale[None, :, None, None] + shift[None, :, None, None]
    return jnp.maximum(y, 0.0)


if __name__ == "__main__":
    key = jax.random.PRNGKey(0)
    k_x, k_p = jax.random.split(key)

    N, Cin, H, W = 2, 4, 16, 16
    Cout = 8

    x = jax.random.normal(k_x, (N, Cin, H, W), jnp.float32)
    params = _init_params(k_p, Cin, Cout)

    out = cblock_forward(x, params)
    out = jax.block_until_ready(out)

    ref = _reference(x, params)
    assert out.shape == (N, Cout, H, W)
    assert jnp.allclose(out, ref, atol=1e-4, rtol=1e-4), "mismatch vs reference"

    print("KERNEL_OK")
</pallas_src>

<mosaic_0001>
module attributes {stable_mosaic.version = 11 : i64} {
  func.func @_cblock_kernel(%arg0: i32, %arg1: memref<512x384xf32, #tpu.memory_space<vmem>>, %arg2: memref<384x128xf32, #tpu.memory_space<vmem>>, %arg3: memref<1x128xf32, #tpu.memory_space<vmem>>, %arg4: memref<512x128xf32, #tpu.memory_space<vmem>>) attributes {dimension_semantics = [#tpu.dimension_semantics<parallel>], iteration_bounds = array<i64: 1>, scalar_prefetch = 0 : i64, scratch_operands = 0 : i64, tpu.core_type = #tpu.core_type<tc>, window_params = [{transform_indices = @transform_0, window_bounds = array<i64: 512, 384>}, {pipeline_mode = #tpu.pipeline_mode<synchronous>, transform_indices = @transform_1, window_bounds = array<i64: 384, 128>}, {pipeline_mode = #tpu.pipeline_mode<synchronous>, transform_indices = @transform_2, window_bounds = array<i64: 1, 128>}, {transform_indices = @transform_3, window_bounds = array<i64: 512, 128>}]} {
    %c0 = arith.constant 0 : index
    %c0_0 = arith.constant 0 : index
    %0 = vector.load %arg1[%c0, %c0_0] : memref<512x384xf32, #tpu.memory_space<vmem>>, vector<512x384xf32>
    %c0_1 = arith.constant 0 : index
    %c0_2 = arith.constant 0 : index
    %1 = vector.load %arg2[%c0_1, %c0_2] : memref<384x128xf32, #tpu.memory_space<vmem>>, vector<384x128xf32>
    %cst = arith.constant dense<0.000000e+00> : vector<512x128xf32>
    %2 = tpu.matmul %0, %1, %cst {dimension_numbers = #tpu.dot_dimension_numbers<[1], [0], [0], [1], [0, 0, 1, 1], [], []>} : vector<512x384xf32>, vector<384x128xf32>, vector<512x128xf32> -> vector<512x128xf32>
    %c0_3 = arith.constant 0 : index
    %c0_4 = arith.constant 0 : index
    %3 = vector.load %arg3[%c0_3, %c0_4] : memref<1x128xf32, #tpu.memory_space<vmem>>, vector<1x128xf32>
    %4 = vector.broadcast %3 : vector<1x128xf32> to vector<512x128xf32>
    %5 = arith.addf %2, %4 : vector<512x128xf32>
    %cst_5 = arith.constant 0.000000e+00 : f32
    %6 = vector.broadcast %cst_5 : f32 to vector<512x128xf32>
    %7 = arith.maximumf %5, %6 : vector<512x128xf32>
    %c0_6 = arith.constant 0 : index
    %c0_7 = arith.constant 0 : index
    %8 = vector.load %arg4[%c0_6, %c0_7] : memref<512x128xf32, #tpu.memory_space<vmem>>, vector<512x128xf32>
    tpu.vector_store %arg4[%c0_6, %c0_7], %7 {strides = array<i32>} : memref<512x128xf32, #tpu.memory_space<vmem>>, vector<512x128xf32>,
    return
  }
  func.func @transform_0(%arg0: i32) -> (i32, i32) {
    %c0_i32 = arith.constant 0 : i32
    %c0_i32_0 = arith.constant 0 : i32
    return %arg0, %c0_i32 : i32, i32
  }
  func.func @transform_1(%arg0: i32) -> (i32, i32) {
    %c0_i32 = arith.constant 0 : i32
    %c0_i32_0 = arith.constant 0 : i32
    %c0_i32_1 = arith.constant 0 : i32
    return %c0_i32, %c0_i32_0 : i32, i32
  }
  func.func @transform_2(%arg0: i32) -> (i32, i32) {
    %c0_i32 = arith.constant 0 : i32
    %c0_i32_0 = arith.constant 0 : i32
    %c0_i32_1 = arith.constant 0 : i32
    return %c0_i32, %c0_i32_0 : i32, i32
  }
  func.func @transform_3(%arg0: i32) -> (i32, i32) {
    %c0_i32 = arith.constant 0 : i32
    %c0_i32_0 = arith.constant 0 : i32
    return %arg0, %c0_i32 : i32, i32
  }
}

</mosaic_0001>

<llo_original>
// kernel: tpu_custom_call.1
$region0: #{tpu_custom_call.1}
  #allocation0 [shape = 'u32[]', space=smem, size = 0x4, offset = 0x4, fixed_abs, tag = 'smem constant byte address 0x4 - core index']
  #allocation1 [shape = 'u32[144,128]{1,0:T(1,128)}', space=vmem, size = 0x12000, scoped, tag = 'internal scratch']
  %s0 = inlined_call_operand.hbm [shape: f32[512,384], index: 0, kind: input, shape index: {}]
  %s1 = inlined_call_operand.hbm [shape: f32[384,128], index: 1, kind: input, shape index: {}]
  %s2 = inlined_call_operand.vmem [shape: f32[1,128], index: 2, kind: input, shape index: {}]
  %s3 = inlined_call_operand.hbm [shape: f32[512,128], index: 3, kind: output, shape index: {}]
  %s4 = sld [smem:[#allocation0]]
  $region30: #{tpu_custom_call.1} parent=0
    _
  %s6 = ssub.s32 1, %s4
  %s7 = scalar_select 0, %s6, %s4
  $region1: #{tpu_custom_call.1} parent=0
    #allocation2 [shape = 'u8[786432]{0}', space=vmem, size = 0xc0000, scoped, tag = 'input window, operand 0, single buffered']
    #allocation3 [shape = 's32[1]{0}', space=sflag, size = 0x4, scoped, tag = 'scoped memory for tpu_custom_call.1']
    #allocation4 [shape = 's32[1]{0}', space=sflag, size = 0x4, scoped, tag = 'scoped memory for tpu_custom_call.1']
    #allocation5 [shape = 'u8[196608]{0}', space=vmem, size = 0x30000, scoped, tag = 'input window, operand 1, single buffered']
    #allocation6 [shape = 's32[1]{0}', space=sflag, size = 0x4, scoped, tag = 'scoped memory for tpu_custom_call.1']
    #allocation7 [shape = 'u8[262144]{0}', space=vmem, size = 0x40000, scoped, tag = 'output window, operand 0, single buffered']
    %8 = vsyncpa [#allocation3], 0
    %9 = vsyncpa [#allocation6], 0
    %10 = vsyncpa [#allocation4], 0
    // Predicated region
    $region2: #{tpu_custom_call.1} parent=1 // pred_check
      _
    $region3: #{tpu_custom_call.1} parent=1 // pred_check_branch
      %12 = sbr.rel (0) target = $region5
    $region4: #{tpu_custom_call.1} parent=1 // pred_region
      %s14 = ssub.s32 24576, 24576
      %15 = vsyncadd [#allocation3], %s14
      %s16 = sshll.u32 [#allocation2], 4
      %s17 = int_to_ptr.vmem [resolvable:$true] %s16
      %22 = dma.hbm_to_vmem [thread:$0]  %s0, 24576, %s17, [#allocation3], 384, 384, 24
    $region5: #{tpu_custom_call.1} parent=1 // pred_fallthru
      _
    // Predicated region
    $region6: #{tpu_custom_call.1} parent=1 // pred_check
      _
    $region7: #{tpu_custom_call.1} parent=1 // pred_check_branch
      %24 = sbr.rel (0) target = $region9
    $region8: #{tpu_custom_call.1} parent=1 // pred_region
      %s26 = ssub.s32 6144, 6144
      %27 = vsyncadd [#allocation6], %s26
      %s28 = sshll.u32 [#allocation5], 4
      %s29 = int_to_ptr.vmem [resolvable:$true] %s28
      %34 = dma.hbm_to_vmem [thread:$0]  %s1, 6144, %s29, [#allocation6], 128, 128, 8
    $region9: #{tpu_custom_call.1} parent=1 // pred_fallthru
      _
    // Predicated region
    $region10: #{tpu_custom_call.1} parent=1 // pred_check
      _
    $region11: #{tpu_custom_call.1} parent=1 // pred_check_branch
      %36 = sbr.rel (0) target = $region13
    $region12: #{tpu_custom_call.1} parent=1 // pred_region
      _
    $region13: #{tpu_custom_call.1} parent=1 // pred_fallthru
      _
    // Predicated region
    $region14: #{tpu_custom_call.1} parent=1 // pred_check
      _
    $region15: #{tpu_custom_call.1} parent=1 // pred_check_branch
      %38 = sbr.rel (0) target = $region17
    $region16: #{tpu_custom_call.1} parent=1 // pred_region
      %39 = dma.done [#allocation3], 24576
    $region17: #{tpu_custom_call.1} parent=1 // pred_fallthru
      _
    // Predicated region
    $region18: #{tpu_custom_call.1} parent=1 // pred_check
      _
    $region19: #{tpu_custom_call.1} parent=1 // pred_check_branch
      %41 = sbr.rel (0) target = $region21
    $region20: #{tpu_custom_call.1} parent=1 // pred_region
      %42 = dma.done [#allocation6], 6144
    $region21: #{tpu_custom_call.1} parent=1 // pred_fallthru
      _
    %v43 = vld [vmem:[#allocation2] sm:$0xff]
    %v44 = vld [vmem:[#allocation2 + $0x8] sm:$0xff]
    %v45 = vld [vmem:[#allocation2 + $0x10] sm:$0xff]
    %v46 = vld [vmem:[#allocation2 + $0x18] sm:$0xff]
    %v47 = vld [vmem:[#allocation2 + $0x20] sm:$0xff]
    %v48 = vld [vmem:[#allocation2 + $0x28] sm:$0xff]
    %v49 = vld [vmem:[#allocation2 + $0x30] sm:$0xff]
    %v50 = vld [vmem:[#allocation2 + $0x38] sm:$0xff]
    %v51 = vld [vmem:[#allocation2 + $0x40] sm:$0xff]
    %v52 = vld [vmem:[#allocation2 + $0x48] sm:$0xff]
    %v53 = vld [vmem:[#allocation2 + $0x50] sm:$0xff]
    %v54 = vld [vmem:[#allocation2 + $0x58] sm:$0xff]
    %v55 = vld [vmem:[#allocation2 + $0x60] sm:$0xff]
    %v56 = vld [vmem:[#allocation2 + $0x68] sm:$0xff]
    %v57 = vld [vmem:[#allocation2 + $0x70] sm:$0xff]
    %v58 = vld [vmem:[#allocation2 + $0x78] sm:$0xff]
    %v59 = vld [vmem:[#allocation2 + $0x80] sm:$0xff]
    %v60 = vld [vmem:[#allocation2 + $0x88] sm:$0xff]
    %v61 = vld [vmem:[#allocation2 + $0x90] sm:$0xff]
    %v62 = vld [vmem:[#allocation2 + $0x98] sm:$0xff]
    %v63 = vld [vmem:[#allocation2 + $0xa0] sm:$0xff]
    %v64 = vld [vmem:[#allocation2 + $0xa8] sm:$0xff]
    %v65 = vld [vmem:[#allocation2 + $0xb0] sm:$0xff]
    %v66 = vld [vmem:[#allocation2 + $0xb8] sm:$0xff]
    %v67 = vld [vmem:[#allocation2 + $0xc0] sm:$0xff]
    %v68 = vld [vmem:[#allocation2 + $0xc8] sm:$0xff]
    %v69 = vld [vmem:[#allocation2 + $0xd0] sm:$0xff]
    %v70 = vld [vmem:[#allocation2 + $0xd8] sm:$0xff]
    %v71 = vld [vmem:[#allocation2 + $0xe0] sm:$0xff]
    %v72 = vld [vmem:[#allocation2 + $0xe8] sm:$0xff]
    %v73 = vld [vmem:[#allocation2 + $0xf0] sm:$0xff]
    %v74 = vld [vmem:[#allocation2 + $0xf8] sm:$0xff]
    %v75 = vld [vmem:[#allocation2 + $0x100] sm:$0xff]
    %v76 = vld [vmem:[#allocation2 + $0x108] sm:$0xff]
    %v77 = vld [vmem:[#allocation2 + $0x110] sm:$0xff]
    %v78 = vld [vmem:[#allocation2 + $0x118] sm:$0xff]
    %v79 = vld [vmem:[#allocation2 + $0x120] sm:$0xff]
    %v80 = vld [vmem:[#allocation2 + $0x128] sm:$0xff]
    %v81 = vld [vmem:[#allocation2 + $0x130] sm:$0xff]
    %v82 = vld [vmem:[#allocation2 + $0x138] sm:$0xff]
    %v83 = vld [vmem:[#allocation2 + $0x140] sm:$0xff]
    %v84 = vld [vmem:[#allocation2 + $0x148] sm:$0xff]
    %v85 = vld [vmem:[#allocation2 + $0x150] sm:$0xff]
    %v86 = vld [vmem:[#allocation2 + $0x158] sm:$0xff]
    %v87 = vld [vmem:[#allocation2 + $0x160] sm:$0xff]
    %v88 = vld [vmem:[#allocation2 + $0x168] sm:$0xff]
    %v89 = vld [vmem:[#allocation2 + $0x170] sm:$0xff]
    %v90 = vld [vmem:[#allocation2 + $0x178] sm:$0xff]
    %v91 = vld [vmem:[#allocation2 + $0x180] sm:$0xff]
    %v92 = vld [vmem:[#allocation2 + $0x188] sm:$0xff]
    %v93 = vld [vmem:[#allocation2 + $0x190] sm:$0xff]
    %v94 = vld [vmem:[#allocation2 + $0x198] sm:$0xff]
    %v95 = vld [vmem:[#allocation2 + $0x1a0] sm:$0xff]
    %v96 = vld [vmem:[#allocation2 + $0x1a8] sm:$0xff]
    %v97 = vld [vmem:[#allocation2 + $0x1b0] sm:$0xff]
    %v98 = vld [vmem:[#allocation2 + $0x1b8] sm:$0xff]
    %v99 = vld [vmem:[#allocation2 + $0x1c0] sm:$0xff]
    %v100 = vld [vmem:[#allocation2 + $0x1c8] sm:$0xff]
    %v101 = vld [vmem:[#allocation2 + $0x1d0] sm:$0xff]
    %v102 = vld [vmem:[#allocation2 + $0x1d8] sm:$0xff]
    %v103 = vld [vmem:[#allocation2 + $0x1e0] sm:$0xff]
    %v104 = vld [vmem:[#allocation2 + $0x1e8] sm:$0xff]
    %v105 = vld [vmem:[#allocation2 + $0x1f0] sm:$0xff]
    %v106 = vld [vmem:[#allocation2 + $0x1f8] sm:$0xff]
    %v107 = vld [vmem:[#allocation2 + $0x200] sm:$0xff]
    %v108 = vld [vmem:[#allocation2 + $0x208] sm:$0xff]
    %v109 = vld [vmem:[#allocation2 + $0x210] sm:$0xff]
    %v110 = vld [vmem:[#allocation2 + $0x218] sm:$0xff]
    %v111 = vld [vmem:[#allocation2 + $0x220] sm:$0xff]
    %v112 = vld [vmem:[#allocation2 + $0x228] sm:$0xff]
    %v113 = vld [vmem:[#allocation2 + $0x230] sm:$0xff]
    %v114 = vld [vmem:[#allocation2 + $0x238] sm:$0xff]
    %v115 = vld [vmem:[#allocation2 + $0x240] sm:$0xff]
    %v116 = vld [vmem:[#allocation2 + $0x248] sm:$0xff]
    %v117 = vld [vmem:[#allocation2 + $0x250] sm:$0xff]
    %v118 = vld [vmem:[#allocation2 + $0x258] sm:$0xff]
    %v119 = vld [vmem:[#allocation2 + $0x260] sm:$0xff]
    %v120 = vld [vmem:[#allocation2 + $0x268] sm:$0xff]
    %v121 = vld [vmem:[#allocation2 + $0x270] sm:$0xff]
    %v122 = vld [vmem:[#allocation2 + $0x278] sm:$0xff]
    %v123 = vld [vmem:[#allocation2 + $0x280] sm:$0xff]
    %v124 = vld [vmem:[#allocation2 + $0x288] sm:$0xff]
    %v125 = vld [vmem:[#allocation2 + $0x290] sm:$0xff]
    %v126 = vld [vmem:[#allocation2 + $0x298] sm:$0xff]
    %v127 = vld [vmem:[#allocation2 + $0x2a0] sm:$0xff]
    %v128 = vld [vmem:[#allocation2 + $0x2a8] sm:$0xff]
    %v129 = vld [vmem:[#allocation2 + $0x2b0] sm:$0xff]
    %v130 = vld [vmem:[#allocation2 + $0x2b8] sm:$0xff]
    %v131 = vld [vmem:[#allocation2 + $0x2c0] sm:$0xff]
    %v132 = vld [vmem:[#allocation2 + $0x2c8] sm:$0xff]
    %v133 = vld [vmem:[#allocation2 + $0x2d0] sm:$0xff]
    %v134 = vld [vmem:[#allocation2 + $0x2d8] sm:$0xff]
    %v135 = vld [vmem:[#allocation2 + $0x2e0] sm:$0xff]
    %v136 = vld [vmem:[#allocation2 + $0x2e8] sm:$0xff]
    %v137 = vld [vmem:[#allocation2 + $0x2f0] sm:$0xff]
    %v138 = vld [vmem:[#allocation2 + $0x2f8] sm:$0xff]
    %v139 = vld [vmem:[#allocation2 + $0x300] sm:$0xff]
    %v140 = vld [vmem:[#allocation2 + $0x308] sm:$0xff]
    %v141 = vld [vmem:[#allocation2 + $0x310] sm:$0xff]
    %v142 = vld [vmem:[#allocation2 + $0x318] sm:$0xff]
    %v143 = vld [vmem:[#allocation2 + $0x320] sm:$0xff]
    %v144 = vld [vmem:[#allocation2 + $0x328] sm:$0xff]
    %v145 = vld [vmem:[#allocation2 + $0x330] sm:$0xff]
    %v146 = vld [vmem:[#allocation2 + $0x338] sm:$0xff]
    %v147 = vld [vmem:[#allocation2 + $0x340] sm:$0xff]
    %v148 = vld [vmem:[#allocation2 + $0x348] sm:$0xff]
    %v149 = vld [vmem:[#allocation2 + $0x350] sm:$0xff]
    %v150 = vld [vmem:[#allocation2 + $0x358] sm:$0xff]
    %v151 = vld [vmem:[#allocation2 + $0x360] sm:$0xff]
    %v152 = vld [vmem:[#allocation2 + $0x368] sm:$0xff]
    %v153 = vld [vmem:[#allocation2 + $0x370] sm:$0xff]
    %v154 = vld [vmem:[#allocation2 + $0x378] sm:$0xff]
    %v155 = vld [vmem:[#allocation2 + $0x380] sm:$0xff]
    %v156 = vld [vmem:[#allocation2 + $0x388] sm:$0xff]
    %v157 = vld [vmem:[#allocation2 + $0x390] sm:$0xff]
    %v158 = vld [vmem:[#allocation2 + $0x398] sm:$0xff]
    %v159 = vld [vmem:[#allocation2 + $0x3a0] sm:$0xff]
    %v160 = vld [vmem:[#allocation2 + $0x3a8] sm:$0xff]
    %v161 = vld [vmem:[#allocation2 + $0x3b0] sm:$0xff]
    %v162 = vld [vmem:[#allocation2 + $0x3b8] sm:$0xff]
    %v163 = vld [vmem:[#allocation2 + $0x3c0] sm:$0xff]
    %v164 = vld [vmem:[#allocation2 + $0x3c8] sm:$0xff]
    %v165 = vld [vmem:[#allocation2 + $0x3d0] sm:$0xff]
    %v166 = vld [vmem:[#allocation2 + $0x3d8] sm:$0xff]
    %v167 = vld [vmem:[#allocation2 + $0x3e0] sm:$0xff]
    %v168 = vld [vmem:[#allocation2 + $0x3e8] sm:$0xff]
    %v169 = vld [vmem:[#allocation2 + $0x3f0] sm:$0xff]
    %v170 = vld [vmem:[#allocation2 + $0x3f8] sm:$0xff]
    %v171 = vld [vmem:[#allocation2 + $0x400] sm:$0xff]
    %v172 = vld [vmem:[#allocation2 + $0x408] sm:$0xff]
    %v173 = vld [vmem:[#allocation2 + $0x410] sm:$0xff]
    %v174 = vld [vmem:[#allocation2 + $0x418] sm:$0xff]
    %v175 = vld [vmem:[#allocation2 + $0x420] sm:$0xff]
    %v176 = vld [vmem:[#allocation2 + $0x428] sm:$0xff]
    %v177 = vld [vmem:[#allocation2 + $0x430] sm:$0xff]
    %v178 = vld [vmem:[#allocation2 + $0x438] sm:$0xff]
    %v179 = vld [vmem:[#allocation2 + $0x440] sm:$0xff]
    %v180 = vld [vmem:[#allocation2 + $0x448] sm:$0xff]
    %v181 = vld [vmem:[#allocation2 + $0x450] sm:$0xff]
    %v182 = vld [vmem:[#allocation2 + $0x458] sm:$0xff]
    %v183 = vld [vmem:[#allocation2 + $0x460] sm:$0xff]
    %v184 = vld [vmem:[#allocation2 + $0x468] sm:$0xff]
    %v185 = vld [vmem:[#allocation2 + $0x470] sm:$0xff]
    %v186 = vld [vmem:[#allocation2 + $0x478] sm:$0xff]
    %v187 = vld [vmem:[#allocation2 + $0x480] sm:$0xff]
    %v188 = vld [vmem:[#allocation2 + $0x488] sm:$0xff]
    %v189 = vld [vmem:[#allocation2 + $0x490] sm:$0xff]
    %v190 = vld [vmem:[#allocation2 + $0x498] sm:$0xff]
    %v191 = vld [vmem:[#allocation2 + $0x4a0] sm:$0xff]
    %v192 = vld [vmem:[#allocation2 + $0x4a8] sm:$0xff]
    %v193 = vld [vmem:[#allocation2 + $0x4b0] sm:$0xff]
    %v194 = vld [vmem:[#allocation2 + $0x4b8] sm:$0xff]
    %v195 = vld [vmem:[#allocation2 + $0x4c0] sm:$0xff]
    %v196 = vld [vmem:[#allocation2 + $0x4c8] sm:$0xff]
    %v197 = vld [vmem:[#allocation2 + $0x4d0] sm:$0xff]
    %v198 = vld [vmem:[#allocation2 + $0x4d8] sm:$0xff]
    %v199 = vld [vmem:[#allocation2 + $0x4e0] sm:$0xff]
    %v200 = vld [vmem:[#allocation2 + $0x4e8] sm:$0xff]
    %v201 = vld [vmem:[#allocation2 + $0x4f0] sm:$0xff]
    %v202 = vld [vmem:[#allocation2 + $0x4f8] sm:$0xff]
    %v203 = vld [vmem:[#allocation2 + $0x500] sm:$0xff]
    %v204 = vld [vmem:[#allocation2 + $0x508] sm:$0xff]
    %v205 = vld [vmem:[#allocation2 + $0x510] sm:$0xff]
    %v206 = vld [vmem:[#allocation2 + $0x518] sm:$0xff]
    %v207 = vld [vmem:[#allocation2 + $0x520] sm:$0xff]
    %v208 = vld [vmem:[#allocation2 + $0x528] sm:$0xff]
    %v209 = vld [vmem:[#allocation2 + $0x530] sm:$0xff]
    %v210 = vld [vmem:[#allocation2 + $0x538] sm:$0xff]
    %v211 = vld [vmem:[#allocation2 + $0x540] sm:$0xff]
    %v212 = vld [vmem:[#allocation2 + $0x548] sm:$0xff]
    %v213 = vld [vmem:[#allocation2 + $0x550] sm:$0xff]
    %v214 = vld [vmem:[#allocation2 + $0x558] sm:$0xff]
    %v215 = vld [vmem:[#allocation2 + $0x560] sm:$0xff]
    %v216 = vld [vmem:[#allocation2 + $0x568] sm:$0xff]
    %v217 = vld [vmem:[#allocation2 + $0x570] sm:$0xff]
    %v218 = vld [vmem:[#allocation2 + $0x578] sm:$0xff]
    %v219 = vld [vmem:[#allocation2 + $0x580] sm:$0xff]
    %v220 = vld [vmem:[#allocation2 + $0x588] sm:$0xff]
    %v221 = vld [vmem:[#allocation2 + $0x590] sm:$0xff]
    %v222 = vld [vmem:[#allocation2 + $0x598] sm:$0xff]
    %v223 = vld [vmem:[#allocation2 + $0x5a0] sm:$0xff]
    %v224 = vld [vmem:[#allocation2 + $0x5a8] sm:$0xff]
    %v225 = vld [vmem:[#allocation2 + $0x5b0] sm:$0xff]
    %v226 = vld [vmem:[#allocation2 + $0x5b8] sm:$0xff]
    %v227 = vld [vmem:[#allocation2 + $0x5c0] sm:$0xff]
    %v228 = vld [vmem:[#allocation2 + $0x5c8] sm:$0xff]
    %v229 = vld [vmem:[#allocation2 + $0x5d0] sm:$0xff]
    %v230 = vld [vmem:[#allocation2 + $0x5d8] sm:$0xff]
    %v231 = vld [vmem:[#allocation2 + $0x5e0] sm:$0xff]
    %v232 = vld [vmem:[#allocation2 + $0x5e8] sm:$0xff]
    %v233 = vld [vmem:[#allocation2 + $0x5f0] sm:$0xff]
    %v234 = vld [vmem:[#allocation2 + $0x5f8] sm:$0xff]
    %v235 = vld [vmem:[#allocation5] sm:$0xff]
    %v236 = vld [vmem:[#allocation5 + $0x8] sm:$0xff]
    %v237 = vld [vmem:[#allocation5 + $0x10] sm:$0xff]
    %v238 = vld [vmem:[#allocation5 + $0x18] sm:$0xff]
    %v239 = vld [vmem:[#allocation5 + $0x20] sm:$0xff]
    %v240 = vld [vmem:[#allocation5 + $0x28] sm:$0xff]
    %v241 = vld [vmem:[#allocation5 + $0x30] sm:$0xff]
    %v242 = vld [vmem:[#allocation5 + $0x38] sm:$0xff]
    %v243 = vld [vmem:[#allocation5 + $0x40] sm:$0xff]
    %v244 = vld [vmem:[#allocation5 + $0x48] sm:$0xff]
    %v245 = vld [vmem:[#allocation5 + $0x50] sm:$0xff]
    %v246 = vld [vmem:[#allocation5 + $0x58] sm:$0xff]
    %v247 = vld [vmem:[#allocation5 + $0x60] sm:$0xff]
    %v248 = vld [vmem:[#allocation5 + $0x68] sm:$0xff]
    %v249 = vld [vmem:[#allocation5 + $0x70] sm:$0xff]
    %v250 = vld [vmem:[#allocation5 + $0x78] sm:$0xff]
    %v251 = vld [vmem:[#allocation5 + $0x80] sm:$0xff]
    %v252 = vld [vmem:[#allocation5 + $0x88] sm:$0xff]
    %v253 = vld [vmem:[#allocation5 + $0x90] sm:$0xff]
    %v254 = vld [vmem:[#allocation5 + $0x98] sm:$0xff]
    %v255 = vld [vmem:[#allocation5 + $0xa0] sm:$0xff]
    %v256 = vld [vmem:[#allocation5 + $0xa8] sm:$0xff]
    %v257 = vld [vmem:[#allocation5 + $0xb0] sm:$0xff]
    %v258 = vld [vmem:[#allocation5 + $0xb8] sm:$0xff]
    %v259 = vld [vmem:[#allocation5 + $0xc0] sm:$0xff]
    %v260 = vld [vmem:[#allocation5 + $0xc8] sm:$0xff]
    %v261 = vld [vmem:[#allocation5 + $0xd0] sm:$0xff]
    %v262 = vld [vmem:[#allocation5 + $0xd8] sm:$0xff]
    %v263 = vld [vmem:[#allocation5 + $0xe0] sm:$0xff]
    %v264 = vld [vmem:[#allocation5 + $0xe8] sm:$0xff]
    %v265 = vld [vmem:[#allocation5 + $0xf0] sm:$0xff]
    %v266 = vld [vmem:[#allocation5 + $0xf8] sm:$0xff]
    %v267 = vld [vmem:[#allocation5 + $0x100] sm:$0xff]
    %v268 = vld [vmem:[#allocation5 + $0x108] sm:$0xff]
    %v269 = vld [vmem:[#allocation5 + $0x110] sm:$0xff]
    %v270 = vld [vmem:[#allocation5 + $0x118] sm:$0xff]
    %v271 = vld [vmem:[#allocation5 + $0x120] sm:$0xff]
    %v272 = vld [vmem:[#allocation5 + $0x128] sm:$0xff]
    %v273 = vld [vmem:[#allocation5 + $0x130] sm:$0xff]
    %v274 = vld [vmem:[#allocation5 + $0x138] sm:$0xff]
    %v275 = vld [vmem:[#allocation5 + $0x140] sm:$0xff]
    %v276 = vld [vmem:[#allocation5 + $0x148] sm:$0xff]
    %v277 = vld [vmem:[#allocation5 + $0x150] sm:$0xff]
    %v278 = vld [vmem:[#allocation5 + $0x158] sm:$0xff]
    %v279 = vld [vmem:[#allocation5 + $0x160] sm:$0xff]
    %v280 = vld [vmem:[#allocation5 + $0x168] sm:$0xff]
    %v281 = vld [vmem:[#allocation5 + $0x170] sm:$0xff]
    %v282 = vld [vmem:[#allocation5 + $0x178] sm:$0xff]
    %v283 = vld [vmem:[%s2] sm:$0x1]
    %v285 = vlaneseq
    %v286 = vshrl.u32 %v285, 7
    %v287 = vsub.s32 0, %v286
    %v288 = vrot.slane %v283, %v287
    %290 = vmatprep.subr.mxu0 0.0
    %291 = vmatpush1.msra.mxu0 %v235
    %292 = vmatprep.subr.mxu0 0.0
    %293 = vmatpush1.msra.mxu0 %v236
    %294 = vmatprep.subr.mxu0 0.0
    %295 = vmatpush1.msra.mxu0 %v237
    %296 = vmatprep.subr.mxu0 0.0
    %297 = vmatpush1.msra.mxu0 %v238
    %298 = vmatprep.subr.mxu0 0.0
    %299 = vmatpush1.msra.mxu0 %v239
    %300 = vmatprep.subr.mxu0 0.0
    %301 = vmatpush1.msra.mxu0 %v240
    %302 = vmatprep.subr.mxu0 0.0
    %303 = vmatpush1.msra.mxu0 %v241
    %304 = vmatprep.subr.mxu0 0.0
    %305 = vmatpush1.msra.mxu0 %v242
    %306 = vmatprep.subr.mxu0 0.0
    %307 = vmatpush1.msra.mxu0 %v243
    %308 = vmatprep.subr.mxu0 0.0
    %309 = vmatpush1.msra.mxu0 %v244
    %310 = vmatprep.subr.mxu0 0.0
    %311 = vmatpush1.msra.mxu0 %v245
    %312 = vmatprep.subr.mxu0 0.0
    %313 = vmatpush1.msra.mxu0 %v246
    %314 = vmatprep.subr.mxu0 0.0
    %315 = vmatpush1.msra.mxu0 %v247
    %316 = vmatprep.subr.mxu0 0.0
    %317 = vmatpush1.msra.mxu0 %v248
    %318 = vmatprep.subr.mxu0 0.0
    %319 = vmatpush1.msra.mxu0 %v249
    %320 = vmatprep.subr.mxu0 0.0
    %321 = vmatpush1.msra.mxu0 %v250
    %322 = vmatprep.subr.mxu0 0.0
    %323 = vmatpush1.msra.mxu0 %v251
    %324 = vmatprep.subr.mxu0 0.0
    %325 = vmatpush1.msra.mxu0 %v252
    %326 = vmatprep.subr.mxu0 0.0
    %327 = vmatpush1.msra.mxu0 %v253
    %328 = vmatprep.subr.mxu0 0.0
    %329 = vmatpush1.msra.mxu0 %v254
    %330 = vmatprep.subr.mxu0 0.0
    %331 = vmatpush1.msra.mxu0 %v255
    %332 = vmatprep.subr.mxu0 0.0
    %333 = vmatpush1.msra.mxu0 %v256
    %334 = vmatprep.subr.mxu0 0.0
    %335 = vmatpush1.msra.mxu0 %v257
    %336 = vmatprep.subr.mxu0 0.0
    %337 = vmatpush1.msra.mxu0 %v258
    %338 = vmatprep.subr.mxu0 0.0
    %339 = vmatpush1.msra.mxu0 %v259
    %340 = vmatprep.subr.mxu0 0.0
    %341 = vmatpush1.msra.mxu0 %v260
    %342 = vmatprep.subr.mxu0 0.0
    %343 = vmatpush1.msra.mxu0 %v261
    %344 = vmatprep.subr.mxu0 0.0
    %345 = vmatpush1.msra.mxu0 %v262
    %346 = vmatprep.subr.mxu0 0.0
    %347 = vmatpush1.msra.mxu0 %v263
    %348 = vmatprep.subr.mxu0 0.0
    %349 = vmatpush1.msra.mxu0 %v264
    %350 = vmatprep.subr.mxu0 0.0
    %351 = vmatpush1.msra.mxu0 %v265
    %352 = vmatprep.subr.mxu0 0.0
    %353 = vmatpush1.msra.mxu0 %v266
    %354 = vmatprep.mubr.f32.mxu0 %v44
    %355 = vmatmul.mubr.f32.gmra.mrb[0].mxu0 %v43
    %v356 = vpop.f32.mrb[0].mxu0
    %v357 = vadd.f32 %v288, %v356
    %v358 = vpop.f32.mrb[0].mxu0
    %359 = vmatprep.mubr.f32.mxu0 %v47
    %360 = vmatmul.mubr.f32.gmra.mrb[0].mxu0 %v46
    %v361 = vpop.f32.mrb[0].mxu0
    %v362 = vadd.f32 %v288, %v361
    %v363 = vpop.f32.mrb[0].mxu0
    %364 = vmatprep.mubr.f32.mxu0 %v50
    %365 = vmatmul.mubr.f32.gmra.mrb[0].mxu0 %v49
    %v366 = vpop.f32.mrb[0].mxu0
    %v367 = vadd.f32 %v288, %v366
    %v368 = vpop.f32.mrb[0].mxu0
    %369 = vmatprep.mubr.f32.mxu0 %v53
    %370 = vmatmul.mubr.f32.gmra.mrb[0].mxu0 %v52
    %v371 = vpop.f32.mrb[0].mxu0
    %v372 = vadd.f32 %v288, %v371
    %v373 = vpop.f32.mrb[0].mxu0
    %374 = vmatprep.mubr.f32.mxu0 %v56
    %375 = vmatmul.mubr.f32.gmra.mrb[0].mxu0 %v55
    %v376 = vpop.f32.mrb[0].mxu0
    %v377 = vadd.f32 %v288, %v376
    %v378 = vpop.f32.mrb[0].mxu0
    %379 = vmatprep.mubr.f32.mxu0 %v59
    %380 = vmatmul.mubr.f32.gmra.mrb[0].mxu0 %v58
    %v381 = vpop.f32.mrb[0].mxu0
    %v382 = vadd.f32 %v288, %v381
    %v383 = vpop.f32.mrb[0].mxu0
    %384 = vmatprep.mubr.f32.mxu0 %v62
    %385 = vmatmul.mubr.f32.gmra.mrb[0].mxu0 %v61
    %v386 = vpop.f32.mrb[0].mxu0
    %v387 = vadd.f32 %v288, %v386
    %v388 = vpop.f32.mrb[0].mxu0
    %389 = vmatprep.mubr.f32.mxu0 %v65
    %390 = vmatmul.mubr.f32.gmra.mrb[0].mxu0 %v64
    %v391 = vpop.f32.mrb[0].mxu0
    %v392 = vadd.f32 %v288, %v391
    %v393 = vpop.f32.mrb[0].mxu0
    %394 = vmatprep.mubr.f32.mxu0 %v68
    %395 = vmatmul.mubr.f32.gmra.mrb[0].mxu0 %v67
    %v396 = vpop.f32.mrb[0].mxu0
    %v397 = vadd.f32 %v288, %v396
    %v398 = vpop.f32.mrb[0].mxu0
    %399 = vmatprep.mubr.f32.mxu0 %v71
    %400 = vmatmul.mubr.f32.gmra.mrb[0].mxu0 %v70
    %v401 = vpop.f32.mrb[0].mxu0
    %v402 = vadd.f32 %v288, %v401
    %v403 = vpop.f32.mrb[0].mxu0
    %404 = vmatprep.mubr.f32.mxu0 %v74
    %405 = vmatmul.mubr.f32.gmra.mrb[0].mxu0 %v73
    %v406 = vpop.f32.mrb[0].mxu0
    %v407 = vadd.f32 %v288, %v406
    %v408 = vpop.f32.mrb[0].mxu0
    %409 = vmatprep.mubr.f32.mxu0 %v77
    %410 = vmatmul.mubr.f32.gmra.mrb[0].mxu0 %v76
    %v411 = vpop.f32.mrb[0].mxu0
    %v412 = vadd.f32 %v288, %v411
    %v413 = vpop.f32.mrb[0].mxu0
    %414 = vmatprep.mubr.f32.mxu0 %v80
    %415 = vmatmul.mubr.f32.gmra.mrb[0].mxu0 %v79
    %v416 = vpop.f32.mrb[0].mxu0
    %v417 = vadd.f32 %v288, %v416
    %v418 = vpop.f32.mrb[0].mxu0
    %419 = vmatprep.mubr.f32.mxu0 %v83
    %420 = vmatmul.mubr.f32.gmra.mrb[0].mxu0 %v82
    %v421 = vpop.f32.mrb[0].mxu0
    %v422 = vadd.f32 %v288, %v421
    %v423 = vpop.f32.mrb[0].mxu0
    %424 = vmatprep.mubr.f32.mxu0 %v86
    %425 = vmatmul.mubr.f32.gmra.mrb[0].mxu0 %v85
    %v426 = vpop.f32.mrb[0].mxu0
    %v427 = vadd.f32 %v288, %v426
    %v428 = vpop.f32.mrb[0].mxu0
    %429 = vmatprep.mubr.f32.mxu0 %v89
    %430 = vmatmul.mubr.f32.gmra.mrb[0].mxu0 %v88
    %v431 = vpop.f32.mrb[0].mxu0
    %v432 = vadd.f32 %v288, %v431
    %v433 = vpop.f32.mrb[0].mxu0
    %434 = vmatprep.mubr.f32.mxu0 %v92
    %435 = vmatmul.mubr.f32.gmra.mrb[0].mxu0 %v91
    %v436 = vpop.f32.mrb[0].mxu0
    %v437 = vadd.f32 %v288, %v436
    %v438 = vpop.f32.mrb[0].mxu0
    %439 = vmatprep.mubr.f32.mxu0 %v95
    %440 = vmatmul.mubr.f32.gmra.mrb[0].mxu0 %v94
    %v441 = vpop.f32.mrb[0].mxu0
    %v442 = vadd.f32 %v288, %v441
    %v443 = vpop.f32.mrb[0].mxu0
    %444 = vmatprep.mubr.f32.mxu0 %v98
    %445 = vmatmul.mubr.f32.gmra.mrb[0].mxu0 %v97
    %v446 = vpop.f32.mrb[0].mxu0
    %v447 = vadd.f32 %v288, %v446
    %v448 = vpop.f32.mrb[0].mxu0
    %449 = vmatprep.mubr.f32.mxu0 %v101
    %450 = vmatmul.mubr.f32.gmra.mrb[0].mxu0 %v100
    %v451 = vpop.f32.mrb[0].mxu0
    %v452 = vadd.f32 %v288, %v451
    %v453 = vpop.f32.mrb[0].mxu0
    %454 = vmatprep.mubr.f32.mxu0 %v104
    %455 = vmatmul.mubr.f32.gmra.mrb[0].mxu0 %v103
    %v456 = vpop.f32.mrb[0].mxu0
    %v457 = vadd.f32 %v288, %v456
    %v458 = vpop.f32.mrb[0].mxu0
    %459 = vmatprep.mubr.f32.mxu0 %v107
    %460 = vmatmul.mubr.f32.gmra.mrb[0].mxu0 %v106
    %v461 = vpop.f32.mrb[0].mxu0
    %v462 = vadd.f32 %v288, %v461
    %v463 = vpop.f32.mrb[0].mxu0
    %464 = vmatprep.mubr.f32.mxu0 %v110
    %465 = vmatmul.mubr.f32.gmra.mrb[0].mxu0 %v109
    %v466 = vpop.f32.mrb[0].mxu0
    %v467 = vadd.f32 %v288, %v466
    %v468 = vpop.f32.mrb[0].mxu0
    %469 = vmatprep.mubr.f32.mxu0 %v113
    %470 = vmatmul.mubr.f32.gmra.mrb[0].mxu0 %v112
    %v471 = vpop.f32.mrb[0].mxu0
    %v472 = vadd.f32 %v288, %v471
    %v473 = vpop.f32.mrb[0].mxu0
    %474 = vmatprep.mubr.f32.mxu0 %v116
    %475 = vmatmul.mubr.f32.gmra.mrb[0].mxu0 %v115
    %v476 = vpop.f32.mrb[0].mxu0
    %v477 = vadd.f32 %v288, %v476
    %v478 = vpop.f32.mrb[0].mxu0
    %479 = vmatprep.mubr.f32.mxu0 %v119
    %480 = vmatmul.mubr.f32.gmra.mrb[0].mxu0 %v118
    %v481 = vpop.f32.mrb[0].mxu0
    %v482 = vadd.f32 %v288, %v481
    %v483 = vpop.f32.mrb[0].mxu0
    %484 = vmatprep.mubr.f32.mxu0 %v122
    %485 = vmatmul.mubr.f32.gmra.mrb[0].mxu0 %v121
    %v486 = vpop.f32.mrb[0].mxu0
    %v487 = vadd.f32 %v288, %v486
    %v488 = vpop.f32.mrb[0].mxu0
    %489 = vmatprep.mubr.f32.mxu0 %v125
    %490 = vmatmul.mubr.f32.gmra.mrb[0].mxu0 %v124
    %v491 = vpop.f32.mrb[0].mxu0
    %v492 = vadd.f32 %v288, %v491
    %v493 = vpop.f32.mrb[0].mxu0
    %494 = vmatprep.mubr.f32.mxu0 %v128
    %495 = vmatmul.mubr.f32.gmra.mrb[0].mxu0 %v127
    %v496 = vpop.f32.mrb[0].mxu0
    %v497 = vadd.f32 %v288, %v496
    %v498 = vpop.f32.mrb[0].mxu0
    %499 = vmatprep.mubr.f32.mxu0 %v131
    %500 = vmatmul.mubr.f32.gmra.mrb[0].mxu0 %v130
    %v501 = vpop.f32.mrb[0].mxu0
    %v502 = vadd.f32 %v288, %v501
    %v503 = vpop.f32.mrb[0].mxu0
    %504 = vmatprep.mubr.f32.mxu0 %v134
    %505 = vmatmul.mubr.f32.gmra.mrb[0].mxu0 %v133
    %v506 = vpop.f32.mrb[0].mxu0
    %v507 = vadd.f32 %v288, %v506
    %v508 = vpop.f32.mrb[0].mxu0
    %509 = vmatprep.mubr.f32.mxu0 %v137
    %510 = vmatmul.mubr.f32.gmra.mrb[0].mxu0 %v136
    %v511 = vpop.f32.mrb[0].mxu0
    %v512 = vadd.f32 %v288, %v511
    %v513 = vpop.f32.mrb[0].mxu0
    %514 = vmatprep.mubr.f32.mxu0 %v140
    %515 = vmatmul.mubr.f32.gmra.mrb[0].mxu0 %v139
    %v516 = vpop.f32.mrb[0].mxu0
    %v517 = vadd.f32 %v288, %v516
    %v518 = vpop.f32.mrb[0].mxu0
    %519 = vmatprep.mubr.f32.mxu0 %v143
    %520 = vmatmul.mubr.f32.gmra.mrb[0].mxu0 %v142
    %v521 = vpop.f32.mrb[0].mxu0
    %v522 = vadd.f32 %v288, %v521
    %v523 = vpop.f32.mrb[0].mxu0
    %524 = vmatprep.mubr.f32.mxu0 %v146
    %525 = vmatmul.mubr.f32.gmra.mrb[0].mxu0 %v145
    %v526 = vpop.f32.mrb[0].mxu0
    %v527 = vadd.f32 %v288, %v526
    %v528 = vpop.f32.mrb[0].mxu0
    %529 = vmatprep.mubr.f32.mxu0 %v149
    %530 = vmatmul.mubr.f32.gmra.mrb[0].mxu0 %v148
    %v531 = vpop.f32.mrb[0].mxu0
    %v532 = vadd.f32 %v288, %v531
    %v533 = vpop.f32.mrb[0].mxu0
    %534 = vmatprep.mubr.f32.mxu0 %v152
    %535 = vmatmul.mubr.f32.gmra.mrb[0].mxu0 %v151
    %v536 = vpop.f32.mrb[0].mxu0
    %v537 = vadd.f32 %v288, %v536
    %v538 = vpop.f32.mrb[0].mxu0
    %539 = vmatprep.mubr.f32.mxu0 %v155
    %540 = vmatmul.mubr.f32.gmra.mrb[0].mxu0 %v154
    %v541 = vpop.f32.mrb[0].mxu0
    %v542 = vadd.f32 %v288, %v541
    %v543 = vpop.f32.mrb[0].mxu0
    %544 = vmatprep.mubr.f32.mxu0 %v158
    %545 = vmatmul.mubr.f32.gmra.mrb[0].mxu0 %v157
    %v546 = vpop.f32.mrb[0].mxu0
    %v547 = vadd.f32 %v288, %v546
    %v548 = vpop.f32.mrb[0].mxu0
    %549 = vmatprep.mubr.f32.mxu0 %v161
    %550 = vmatmul.mubr.f32.gmra.mrb[0].mxu0 %v160
    %v551 = vpop.f32.mrb[0].mxu0
    %v552 = vadd.f32 %v288, %v551
    %v553 = vpop.f32.mrb[0].mxu0
    %554 = vmatprep.mubr.f32.mxu0 %v164
    %555 = vmatmul.mubr.f32.gmra.mrb[0].mxu0 %v163
    %v556 = vpop.f32.mrb[0].mxu0
    %v557 = vadd.f32 %v288, %v556
    %v558 = vpop.f32.mrb[0].mxu0
    %559 = vmatprep.mubr.f32.mxu0 %v167
    %560 = vmatmul.mubr.f32.gmra.mrb[0].mxu0 %v166
    %v561 = vpop.f32.mrb[0].mxu0
    %v562 = vadd.f32 %v288, %v561
    %v563 = vpop.f32.mrb[0].mxu0
    %564 = vmatprep.mubr.f32.mxu0 %v170
    %565 = vmatmul.mubr.f32.gmra.mrb[0].mxu0 %v169
    %v566 = vpop.f32.mrb[0].mxu0
    %v567 = vadd.f32 %v288, %v566
    %v568 = vpop.f32.mrb[0].mxu0
    %569 = vmatprep.mubr.f32.mxu0 %v173
    %570 = vmatmul.mubr.f32.gmra.mrb[0].mxu0 %v172
    %v571 = vpop.f32.mrb[0].mxu0
    %v572 = vadd.f32 %v288, %v571
    %v573 = vpop.f32.mrb[0].mxu0
    %574 = vmatprep.mubr.f32.mxu0 %v176
    %575 = vmatmul.mubr.f32.gmra.mrb[0].mxu0 %v175
    %v576 = vpop.f32.mrb[0].mxu0
    %v577 = vadd.f32 %v288, %v576
    %v578 = vpop.f32.mrb[0].mxu0
    %579 = vmatprep.mubr.f32.mxu0 %v179
    %580 = vmatmul.mubr.f32.gmra.mrb[0].mxu0 %v178
    %v581 = vpop.f32.mrb[0].mxu0
    %v582 = vadd.f32 %v288, %v581
    %v583 = vpop.f32.mrb[0].mxu0
    %584 = vmatprep.mubr.f32.mxu0 %v182
    %585 = vmatmul.mubr.f32.gmra.mrb[0].mxu0 %v181
    %v586 = vpop.f32.mrb[0].mxu0
    %v587 = vadd.f32 %v288, %v586
    %v588 = vpop.f32.mrb[0].mxu0
    %589 = vmatprep.mubr.f32.mxu0 %v185
    %590 = vmatmul.mubr.f32.gmra.mrb[0].mxu0 %v184
    %v591 = vpop.f32.mrb[0].mxu0
    %v592 = vadd.f32 %v288, %v591
    %v593 = vpop.f32.mrb[0].mxu0
    %594 = vmatprep.mubr.f32.mxu0 %v188
    %595 = vmatmul.mubr.f32.gmra.mrb[0].mxu0 %v187
    %v596 = vpop.f32.mrb[0].mxu0
    %v597 = vadd.f32 %v288, %v596
    %v598 = vpop.f32.mrb[0].mxu0
    %599 = vmatprep.mubr.f32.mxu0 %v191
    %600 = vmatmul.mubr.f32.gmra.mrb[0].mxu0 %v190
    %v601 = vpop.f32.mrb[0].mxu0
    %v602 = vadd.f32 %v288, %v601
    %v603 = vpop.f32.mrb[0].mxu0
    %604 = vmatprep.mubr.f32.mxu0 %v194
    %605 = vmatmul.mubr.f32.gmra.mrb[0].mxu0 %v193
    %v606 = vpop.f32.mrb[0].mxu0
    %v607 = vadd.f32 %v288, %v606
    %v608 = vpop.f32.mrb[0].mxu0
    %609 = vmatprep.mubr.f32.mxu0 %v197
    %610 = vmatmul.mubr.f32.gmra.mrb[0].mxu0 %v196
    %v611 = vpop.f32.mrb[0].mxu0
    %v612 = vadd.f32 %v288, %v611
    %v613 = vpop.f32.mrb[0].mxu0
    %614 = vmatprep.mubr.f32.mxu0 %v200
    %615 = vmatmul.mubr.f32.gmra.mrb[0].mxu0 %v199
    %v616 = vpop.f32.mrb[0].mxu0
    %v617 = vadd.f32 %v288, %v616
    %v618 = vpop.f32.mrb[0].mxu0
    %619 = vmatprep.mubr.f32.mxu0 %v203
    %620 = vmatmul.mubr.f32.gmra.mrb[0].mxu0 %v202
    %v621 = vpop.f32.mrb[0].mxu0
    %v622 = vadd.f32 %v288, %v621
    %v623 = vpop.f32.mrb[0].mxu0
    %624 = vmatprep.mubr.f32.mxu0 %v206
    %625 = vmatmul.mubr.f32.gmra.mrb[0].mxu0 %v205
    %v626 = vpop.f32.mrb[0].mxu0
    %v627 = vadd.f32 %v288, %v626
    %v628 = vpop.f32.mrb[0].mxu0
    %629 = vmatprep.mubr.f32.mxu0 %v209
    %630 = vmatmul.mubr.f32.gmra.mrb[0].mxu0 %v208
    %v631 = vpop.f32.mrb[0].mxu0
    %v632 = vadd.f32 %v288, %v631
    %v633 = vpop.f32.mrb[0].mxu0
    %634 = vmatprep.mubr.f32.mxu0 %v212
    %635 = vmatmul.mubr.f32.gmra.mrb[0].mxu0 %v211
    %v636 = vpop.f32.mrb[0].mxu0
    %v637 = vadd.f32 %v288, %v636
    %v638 = vpop.f32.mrb[0].mxu0
    %639 = vmatprep.mubr.f32.mxu0 %v215
    %640 = vmatmul.mubr.f32.gmra.mrb[0].mxu0 %v214
    %v641 = vpop.f32.mrb[0].mxu0
    %v642 = vadd.f32 %v288, %v641
    %v643 = vpop.f32.mrb[0].mxu0
    %644 = vmatprep.mubr.f32.mxu0 %v218
    %645 = vmatmul.mubr.f32.gmra.mrb[0].mxu0 %v217
    %v646 = vpop.f32.mrb[0].mxu0
    %v647 = vadd.f32 %v288, %v646
    %v648 = vpop.f32.mrb[0].mxu0
    %649 = vmatprep.mubr.f32.mxu0 %v221
    %650 = vmatmul.mubr.f32.gmra.mrb[0].mxu0 %v220
    %v651 = vpop.f32.mrb[0].mxu0
    %v652 = vadd.f32 %v288, %v651
    %v653 = vpop.f32.mrb[0].mxu0
    %654 = vmatprep.mubr.f32.mxu0 %v224
    %655 = vmatmul.mubr.f32.gmra.mrb[0].mxu0 %v223
    %v656 = vpop.f32.mrb[0].mxu0
    %v657 = vadd.f32 %v288, %v656
    %v658 = vpop.f32.mrb[0].mxu0
    %659 = vmatprep.mubr.f32.mxu0 %v227
    %660 = vmatmul.mubr.f32.gmra.mrb[0].mxu0 %v226
    %v661 = vpop.f32.mrb[0].mxu0
    %v662 = vadd.f32 %v288, %v661
    %v663 = vpop.f32.mrb[0].mxu0
    %664 = vmatprep.mubr.f32.mxu0 %v230
    %665 = vmatmul.mubr.f32.gmra.mrb[0].mxu0 %v229
    %v666 = vpop.f32.mrb[0].mxu0
    %v667 = vadd.f32 %v288, %v666
    %v668 = vpop.f32.mrb[0].mxu0
    %669 = vmatprep.mubr.f32.mxu0 %v233
    %670 = vmatmul.mubr.f32.gmra.mrb[0].mxu0 %v232
    %v671 = vpop.f32.mrb[0].mxu0
    %v672 = vadd.f32 %v288, %v671
    %v673 = vpop.f32.mrb[0].mxu0
    %674 = vdwg.mxu0
    %675 = vmatprep.subr.mxu0 0.0
    %676 = vmatpush1.msra.mxu0 %v267
    %677 = vmatprep.subr.mxu0 0.0
    %678 = vmatpush1.msra.mxu0 %v268
    %679 = vmatprep.subr.mxu0 0.0
    %680 = vmatpush1.msra.mxu0 %v269
    %681 = vmatprep.subr.mxu0 0.0
    %682 = vmatpush1.msra.mxu0 %v270
    %683 = vmatprep.subr.mxu0 0.0
    %684 = vmatpush1.msra.mxu0 %v271
    %685 = vmatprep.subr.mxu0 0.0
    %686 = vmatpush1.msra.mxu0 %v272
    %687 = vmatprep.subr.mxu0 0.0
    %688 = vmatpush1.msra.mxu0 %v273
    %689 = vmatprep.subr.mxu0 0.0
    %690 = vmatpush1.msra.mxu0 %v274
    %691 = vmatprep.subr.mxu0 0.0
    %692 = vmatpush1.msra.mxu0 %v275
    %693 = vmatprep.subr.mxu0 0.0
    %694 = vmatpush1.msra.mxu0 %v276
    %695 = vmatprep.subr.mxu0 0.0
    %696 = vmatpush1.msra.mxu0 %v277
    %697 = vmatprep.subr.mxu0 0.0
    %698 = vmatpush1.msra.mxu0 %v278
    %699 = vmatprep.subr.mxu0 0.0
    %700 = vmatpush1.msra.mxu0 %v279
    %701 = vmatprep.subr.mxu0 0.0
    %702 = vmatpush1.msra.mxu0 %v280
    %703 = vmatprep.subr.mxu0 0.0
    %704 = vmatpush1.msra.mxu0 %v281
    %705 = vmatprep.subr.mxu0 0.0
    %706 = vmatpush1.msra.mxu0 %v282
    %707 = vmatprep.subr.mxu0 0.0
    %708 = vmatpush1.msra.mxu0 0.0
    %709 = vmatprep.subr.mxu0 0.0
    %710 = vmatpush1.msra.mxu0 0.0
    %711 = vmatprep.subr.mxu0 0.0
    %712 = vmatpush1.msra.mxu0 0.0
    %713 = vmatprep.subr.mxu0 0.0
    %714 = vmatpush1.msra.mxu0 0.0
    %715 = vmatprep.subr.mxu0 0.0
    %716 = vmatpush1.msra.mxu0 0.0
    %717 = vmatprep.subr.mxu0 0.0
    %718 = vmatpush1.msra.mxu0 0.0
    %719 = vmatprep.subr.mxu0 0.0
    %720 = vmatpush1.msra.mxu0 0.0
    %721 = vmatprep.subr.mxu0 0.0
    %722 = vmatpush1.msra.mxu0 0.0
    %723 = vmatprep.subr.mxu0 0.0
    %724 = vmatpush1.msra.mxu0 0.0
    %725 = vmatprep.subr.mxu0 0.0
    %726 = vmatpush1.msra.mxu0 0.0
    %727 = vmatprep.subr.mxu0 0.0
    %728 = vmatpush1.msra.mxu0 0.0
    %729 = vmatprep.subr.mxu0 0.0
    %730 = vmatpush1.msra.mxu0 0.0
    %731 = vmatprep.subr.mxu0 0.0
    %732 = vmatpush1.msra.mxu0 0.0
    %733 = vmatprep.subr.mxu0 0.0
    %734 = vmatpush1.msra.mxu0 0.0
    %735 = vmatprep.subr.mxu0 0.0
    %736 = vmatpush1.msra.mxu0 0.0
    %737 = vmatprep.subr.mxu0 0.0
    %738 = vmatpush1.msra.mxu0 0.0
    %739 = vmatprep.mubr.f32.mxu0 0.0
    %740 = vmatmul.mubr.f32.gmra.mrb[0].mxu0 %v45
    %v741 = vpop.f32.mrb[0].mxu0
    %v742 = vadd.f32 %v357, %v741
    %v743 = vpop.f32.mrb[0].mxu0
    %744 = vmatprep.mubr.f32.mxu0 0.0
    %745 = vmatmul.mubr.f32.gmra.mrb[0].mxu0 %v48
    %v746 = vpop.f32.mrb[0].mxu0
    %v747 = vadd.f32 %v362, %v746
    %v748 = vpop.f32.mrb[0].mxu0
    %749 = vmatprep.mubr.f32.mxu0 0.0
    %750 = vmatmul.mubr.f32.gmra.mrb[0].mxu0 %v51
    %v751 = vpop.f32.mrb[0].mxu0
    %v752 = vadd.f32 %v367, %v751
    %v753 = vpop.f32.mrb[0].mxu0
    %754 = vmatprep.mubr.f32.mxu0 0.0
    %755 = vmatmul.mubr.f32.gmra.mrb[0].mxu0 %v54
    %v756 = vpop.f32.mrb[0].mxu0
    %v757 = vadd.f32 %v372, %v756
    %v758 = vpop.f32.mrb[0].mxu0
    %759 = vmatprep.mubr.f32.mxu0 0.0
    %760 = vmatmul.mubr.f32.gmra.mrb[0].mxu0 %v57
    %v761 = vpop.f32.mrb[0].mxu0
    %v762 = vadd.f32 %v377, %v761
    %v763 = vpop.f32.mrb[0].mxu0
    %764 = vmatprep.mubr.f32.mxu0 0.0
    %765 = vmatmul.mubr.f32.gmra.mrb[0].mxu0 %v60
    %v766 = vpop.f32.mrb[0].mxu0
    %v767 = vadd.f32 %v382, %v766
    %v768 = vpop.f32.mrb[0].mxu0
    %769 = vmatprep.mubr.f32.mxu0 0.0
    %770 = vmatmul.mubr.f32.gmra.mrb[0].mxu0 %v63
    %v771 = vpop.f32.mrb[0].mxu0
    %v772 = vadd.f32 %v387, %v771
    %v773 = vpop.f32.mrb[0].mxu0
    %774 = vmatprep.mubr.f32.mxu0 0.0
    %775 = vmatmul.mubr.f32.gmra.mrb[0].mxu0 %v66
    %v776 = vpop.f32.mrb[0].mxu0
    %v777 = vadd.f32 %v392, %v776
    %v778 = vpop.f32.mrb[0].mxu0
    %779 = vmatprep.mubr.f32.mxu0 0.0
    %780 = vmatmul.mubr.f32.gmra.mrb[0].mxu0 %v69
    %v781 = vpop.f32.mrb[0].mxu0
    %v782 = vadd.f32 %v397, %v781
    %v783 = vpop.f32.mrb[0].mxu0
    %784 = vmatprep.mubr.f32.mxu0 0.0
    %785 = vmatmul.mubr.f32.gmra.mrb[0].mxu0 %v72
    %v786 = vpop.f32.mrb[0].mxu0
    %v787 = vadd.f32 %v402, %v786
    %v788 = vpop.f32.mrb[0].mxu0
    %789 = vmatprep.mubr.f32.mxu0 0.0
    %790 = vmatmul.mubr.f32.gmra.mrb[0].mxu0 %v75
    %v791 = vpop.f32.mrb[0].mxu0
    %v792 = vadd.f32 %v407, %v791
    %v793 = vpop.f32.mrb[0].mxu0
    %794 = vmatprep.mubr.f32.mxu0 0.0
    %795 = vmatmul.mubr.f32.gmra.mrb[0].mxu0 %v78
    %v796 = vpop.f32.mrb[0].mxu0
    %v797 = vadd.f32 %v412, %v796
    %v798 = vpop.f32.mrb[0].mxu0
    %799 = vmatprep.mubr.f32.mxu0 0.0
    %800 = vmatmul.mubr.f32.gmra.mrb[0].mxu0 %v81
    %v801 = vpop.f32.mrb[0].mxu0
    %v802 = vadd.f32 %v417, %v801
    %v803 = vpop.f32.mrb[0].mxu0
    %804 = vmatprep.mubr.f32.mxu0 0.0
    %805 = vmatmul.mubr.f32.gmra.mrb[0].mxu0 %v84
    %v806 = vpop.f32.mrb[0].mxu0
    %v807 = vadd.f32 %v422, %v806
    %v808 = vpop.f32.mrb[0].mxu0
    %809 = vmatprep.mubr.f32.mxu0 0.0
    %810 = vmatmul.mubr.f32.gmra.mrb[0].mxu0 %v87
    %v811 = vpop.f32.mrb[0].mxu0
    %v812 = vadd.f32 %v427, %v811
    %v813 = vpop.f32.mrb[0].mxu0
    %814 = vmatprep.mubr.f32.mxu0 0.0
    %815 = vmatmul.mubr.f32.gmra.mrb[0].mxu0 %v90
    %v816 = vpop.f32.mrb[0].mxu0
    %v817 = vadd.f32 %v432, %v816
    %v818 = vpop.f32.mrb[0].mxu0
    %819 = vmatprep.mubr.f32.mxu0 0.0
    %820 = vmatmul.mubr.f32.gmra.mrb[0].mxu0 %v93
    %v821 = vpop.f32.mrb[0].mxu0
    %v822 = vadd.f32 %v437, %v821
    %v823 = vpop.f32.mrb[0].mxu0
    %824 = vmatprep.mubr.f32.mxu0 0.0
    %825 = vmatmul.mubr.f32.gmra.mrb[0].mxu0 %v96
    %v826 = vpop.f32.mrb[0].mxu0
    %v827 = vadd.f32 %v442, %v826
    %v828 = vpop.f32.mrb[0].mxu0
    %829 = vmatprep.mubr.f32.mxu0 0.0
    %830 = vmatmul.mubr.f32.gmra.mrb[0].mxu0 %v99
    %v831 = vpop.f32.mrb[0].mxu0
    %v832 = vadd.f32 %v447, %v831
    %v833 = vpop.f32.mrb[0].mxu0
    %834 = vmatprep.mubr.f32.mxu0 0.0
    %835 = vmatmul.mubr.f32.gmra.mrb[0].mxu0 %v102
    %v836 = vpop.f32.mrb[0].mxu0
    %v837 = vadd.f32 %v452, %v836
    %v838 = vpop.f32.mrb[0].mxu0
    %839 = vmatprep.mubr.f32.mxu0 0.0
    %840 = vmatmul.mubr.f32.gmra.mrb[0].mxu0 %v105
    %v841 = vpop.f32.mrb[0].mxu0
    %v842 = vadd.f32 %v457, %v841
    %v843 = vpop.f32.mrb[0].mxu0
    %844 = vmatprep.mubr.f32.mxu0 0.0
    %845 = vmatmul.mubr.f32.gmra.mrb[0].mxu0 %v108
    %v846 = vpop.f32.mrb[0].mxu0
    %v847 = vadd.f32 %v462, %v846
    %v848 = vpop.f32.mrb[0].mxu0
    %849 = vmatprep.mubr.f32.mxu0 0.0
    %850 = vmatmul.mubr.f32.gmra.mrb[0].mxu0 %v111
    %v851 = vpop.f32.mrb[0].mxu0
    %v852 = vadd.f32 %v467, %v851
    %v853 = vpop.f32.mrb[0].mxu0
    %854 = vmatprep.mubr.f32.mxu0 0.0
    %855 = vmatmul.mubr.f32.gmra.mrb[0].mxu0 %v114
    %v856 = vpop.f32.mrb[0].mxu0
    %v857 = vadd.f32 %v472, %v856
    %v858 = vpop.f32.mrb[0].mxu0
    %859 = vmatprep.mubr.f32.mxu0 0.0
    %860 = vmatmul.mubr.f32.gmra.mrb[0].mxu0 %v117
    %v861 = vpop.f32.mrb[0].mxu0
    %v862 = vadd.f32 %v477, %v861
    %v863 = vpop.f32.mrb[0].mxu0
    %864 = vmatprep.mubr.f32.mxu0 0.0
    %865 = vmatmul.mubr.f32.gmra.mrb[0].mxu0 %v120
    %v866 = vpop.f32.mrb[0].mxu0
    %v867 = vadd.f32 %v482, %v866
    %v868 = vpop.f32.mrb[0].mxu0
    %869 = vmatprep.mubr.f32.mxu0 0.0
    %870 = vmatmul.mubr.f32.gmra.mrb[0].mxu0 %v123
    %v871 = vpop.f32.mrb[0].mxu0
    %v872 = vadd.f32 %v487, %v871
    %v873 = vpop.f32.mrb[0].mxu0
    %874 = vmatprep.mubr.f32.mxu0 0.0
    %875 = vmatmul.mubr.f32.gmra.mrb[0].mxu0 %v126
    %v876 = vpop.f32.mrb[0].mxu0
    %v877 = vadd.f32 %v492, %v876
    %v878 = vpop.f32.mrb[0].mxu0
    %879 = vmatprep.mubr.f32.mxu0 0.0
    %880 = vmatmul.mubr.f32.gmra.mrb[0].mxu0 %v129
    %v881 = vpop.f32.mrb[0].mxu0
    %v882 = vadd.f32 %v497, %v881
    %v883 = vpop.f32.mrb[0].mxu0
    %884 = vmatprep.mubr.f32.mxu0 0.0
    %885 = vmatmul.mubr.f32.gmra.mrb[0].mxu0 %v132
    %v886 = vpop.f32.mrb[0].mxu0
    %v887 = vadd.f32 %v502, %v886
    %v888 = vpop.f32.mrb[0].mxu0
    %889 = vmatprep.mubr.f32.mxu0 0.0
    %890 = vmatmul.mubr.f32.gmra.mrb[0].mxu0 %v135
    %v891 = vpop.f32.mrb[0].mxu0
    %v892 = vadd.f32 %v507, %v891
    %v893 = vpop.f32.mrb[0].mxu0
    %894 = vmatprep.mubr.f32.mxu0 0.0
    %895 = vmatmul.mubr.f32.gmra.mrb[0].mxu0 %v138
    %v896 = vpop.f32.mrb[0].mxu0
    %v897 = vadd.f32 %v512, %v896
    %v898 = vpop.f32.mrb[0].mxu0
    %899 = vmatprep.mubr.f32.mxu0 0.0
    %900 = vmatmul.mubr.f32.gmra.mrb[0].mxu0 %v141
    %v901 = vpop.f32.mrb[0].mxu0
    %v902 = vadd.f32 %v517, %v901
    %v903 = vpop.f32.mrb[0].mxu0
    %904 = vmatprep.mubr.f32.mxu0 0.0
    %905 = vmatmul.mubr.f32.gmra.mrb[0].mxu0 %v144
    %v906 = vpop.f32.mrb[0].mxu0
    %v907 = vadd.f32 %v522, %v906
    %v908 = vpop.f32.mrb[0].mxu0
    %909 = vmatprep.mubr.f32.mxu0 0.0
    %910 = vmatmul.mubr.f32.gmra.mrb[0].mxu0 %v147
    %v911 = vpop.f32.mrb[0].mxu0
    %v912 = vadd.f32 %v527, %v911
    %v913 = vpop.f32.mrb[0].mxu0
    %914 = vmatprep.mubr.f32.mxu0 0.0
    %915 = vmatmul.mubr.f32.gmra.mrb[0].mxu0 %v150
    %v916 = vpop.f32.mrb[0].mxu0
    %v917 = vadd.f32 %v532, %v916
    %v918 = vpop.f32.mrb[0].mxu0
    %919 = vmatprep.mubr.f32.mxu0 0.0
    %920 = vmatmul.mubr.f32.gmra.mrb[0].mxu0 %v153
    %v921 = vpop.f32.mrb[0].mxu0
    %v922 = vadd.f32 %v537, %v921
    %v923 = vpop.f32.mrb[0].mxu0
    %924 = vmatprep.mubr.f32.mxu0 0.0
    %925 = vmatmul.mubr.f32.gmra.mrb[0].mxu0 %v156
    %v926 = vpop.f32.mrb[0].mxu0
    %v927 = vadd.f32 %v542, %v926
    %v928 = vpop.f32.mrb[0].mxu0
    %929 = vmatprep.mubr.f32.mxu0 0.0
    %930 = vmatmul.mubr.f32.gmra.mrb[0].mxu0 %v159
    %v931 = vpop.f32.mrb[0].mxu0
    %v932 = vadd.f32 %v547, %v931
    %v933 = vpop.f32.mrb[0].mxu0
    %934 = vmatprep.mubr.f32.mxu0 0.0
    %935 = vmatmul.mubr.f32.gmra.mrb[0].mxu0 %v162
    %v936 = vpop.f32.mrb[0].mxu0
    %v937 = vadd.f32 %v552, %v936
    %v938 = vpop.f32.mrb[0].mxu0
    %939 = vmatprep.mubr.f32.mxu0 0.0
    %940 = vmatmul.mubr.f32.gmra.mrb[0].mxu0 %v165
    %v941 = vpop.f32.mrb[0].mxu0
    %v942 = vadd.f32 %v557, %v941
    %v943 = vpop.f32.mrb[0].mxu0
    %944 = vmatprep.mubr.f32.mxu0 0.0
    %945 = vmatmul.mubr.f32.gmra.mrb[0].mxu0 %v168
    %v946 = vpop.f32.mrb[0].mxu0
    %v947 = vadd.f32 %v562, %v946
    %v948 = vpop.f32.mrb[0].mxu0
    %949 = vmatprep.mubr.f32.mxu0 0.0
    %950 = vmatmul.mubr.f32.gmra.mrb[0].mxu0 %v171
    %v951 = vpop.f32.mrb[0].mxu0
    %v952 = vadd.f32 %v567, %v951
    %v953 = vpop.f32.mrb[0].mxu0
    %954 = vmatprep.mubr.f32.mxu0 0.0
    %955 = vmatmul.mubr.f32.gmra.mrb[0].mxu0 %v174
    %v956 = vpop.f32.mrb[0].mxu0
    %v957 = vadd.f32 %v572, %v956
    %v958 = vpop.f32.mrb[0].mxu0
    %959 = vmatprep.mubr.f32.mxu0 0.0
    %960 = vmatmul.mubr.f32.gmra.mrb[0].mxu0 %v177
    %v961 = vpop.f32.mrb[0].mxu0
    %v962 = vadd.f32 %v577, %v961
    %v963 = vpop.f32.mrb[0].mxu0
    %964 = vmatprep.mubr.f32.mxu0 0.0
    %965 = vmatmul.mubr.f32.gmra.mrb[0].mxu0 %v180
    %v966 = vpop.f32.mrb[0].mxu0
    %v967 = vadd.f32 %v582, %v966
    %v968 = vpop.f32.mrb[0].mxu0
    %969 = vmatprep.mubr.f32.mxu0 0.0
    %970 = vmatmul.mubr.f32.gmra.mrb[0].mxu0 %v183
    %v971 = vpop.f32.mrb[0].mxu0
    %v972 = vadd.f32 %v587, %v971
    %v973 = vpop.f32.mrb[0].mxu0
    %974 = vmatprep.mubr.f32.mxu0 0.0
    %975 = vmatmul.mubr.f32.gmra.mrb[0].mxu0 %v186
    %v976 = vpop.f32.mrb[0].mxu0
    %v977 = vadd.f32 %v592, %v976
    %v978 = vpop.f32.mrb[0].mxu0
    %979 = vmatprep.mubr.f32.mxu0 0.0
    %980 = vmatmul.mubr.f32.gmra.mrb[0].mxu0 %v189
    %v981 = vpop.f32.mrb[0].mxu0
    %v982 = vadd.f32 %v597, %v981
    %v983 = vpop.f32.mrb[0].mxu0
    %984 = vmatprep.mubr.f32.mxu0 0.0
    %985 = vmatmul.mubr.f32.gmra.mrb[0].mxu0 %v192
    %v986 = vpop.f32.mrb[0].mxu0
    %v987 = vadd.f32 %v602, %v986
    %v988 = vpop.f32.mrb[0].mxu0
    %989 = vmatprep.mubr.f32.mxu0 0.0
    %990 = vmatmul.mubr.f32.gmra.mrb[0].mxu0 %v195
    %v991 = vpop.f32.mrb[0].mxu0
    %v992 = vadd.f32 %v607, %v991
    %v993 = vpop.f32.mrb[0].mxu0
    %994 = vmatprep.mubr.f32.mxu0 0.0
    %995 = vmatmul.mubr.f32.gmra.mrb[0].mxu0 %v198
    %v996 = vpop.f32.mrb[0].mxu0
    %v997 = vadd.f32 %v612, %v996
    %v998 = vpop.f32.mrb[0].mxu0
    %999 = vmatprep.mubr.f32.mxu0 0.0
    %1000 = vmatmul.mubr.f32.gmra.mrb[0].mxu0 %v201
    %v1001 = vpop.f32.mrb[0].mxu0
    %v1002 = vadd.f32 %v617, %v1001
    %v1003 = vpop.f32.mrb[0].mxu0
    %1004 = vmatprep.mubr.f32.mxu0 0.0
    %1005 = vmatmul.mubr.f32.gmra.mrb[0].mxu0 %v204
    %v1006 = vpop.f32.mrb[0].mxu0
    %v1007 = vadd.f32 %v622, %v1006
    %v1008 = vpop.f32.mrb[0].mxu0
    %1009 = vmatprep.mubr.f32.mxu0 0.0
    %1010 = vmatmul.mubr.f32.gmra.mrb[0].mxu0 %v207
    %v1011 = vpop.f32.mrb[0].mxu0
    %v1012 = vadd.f32 %v627, %v1011
    %v1013 = vpop.f32.mrb[0].mxu0
    %1014 = vmatprep.mubr.f32.mxu0 0.0
    %1015 = vmatmul.mubr.f32.gmra.mrb[0].mxu0 %v210
    %v1016 = vpop.f32.mrb[0].mxu0
    %v1017 = vadd.f32 %v632, %v1016
    %v1018 = vpop.f32.mrb[0].mxu0
    %1019 = vmatprep.mubr.f32.mxu0 0.0
    %1020 = vmatmul.mubr.f32.gmra.mrb[0].mxu0 %v213
    %v1021 = vpop.f32.mrb[0].mxu0
    %v1022 = vadd.f32 %v637, %v1021
    %v1023 = vpop.f32.mrb[0].mxu0
    %1024 = vmatprep.mubr.f32.mxu0 0.0
    %1025 = vmatmul.mubr.f32.gmra.mrb[0].mxu0 %v216
    %v1026 = vpop.f32.mrb[0].mxu0
    %v1027 = vadd.f32 %v642, %v1026
    %v1028 = vpop.f32.mrb[0].mxu0
    %1029 = vmatprep.mubr.f32.mxu0 0.0
    %1030 = vmatmul.mubr.f32.gmra.mrb[0].mxu0 %v219
    %v1031 = vpop.f32.mrb[0].mxu0
    %v1032 = vadd.f32 %v647, %v1031
    %v1033 = vpop.f32.mrb[0].mxu0
    %1034 = vmatprep.mubr.f32.mxu0 0.0
    %1035 = vmatmul.mubr.f32.gmra.mrb[0].mxu0 %v222
    %v1036 = vpop.f32.mrb[0].mxu0
    %v1037 = vadd.f32 %v652, %v1036
    %v1038 = vpop.f32.mrb[0].mxu0
    %1039 = vmatprep.mubr.f32.mxu0 0.0
    %1040 = vmatmul.mubr.f32.gmra.mrb[0].mxu0 %v225
    %v1041 = vpop.f32.mrb[0].mxu0
    %v1042 = vadd.f32 %v657, %v1041
    %v1043 = vpop.f32.mrb[0].mxu0
    %1044 = vmatprep.mubr.f32.mxu0 0.0
    %1045 = vmatmul.mubr.f32.gmra.mrb[0].mxu0 %v228
    %v1046 = vpop.f32.mrb[0].mxu0
    %v1047 = vadd.f32 %v662, %v1046
    %v1048 = vpop.f32.mrb[0].mxu0
    %1049 = vmatprep.mubr.f32.mxu0 0.0
    %1050 = vmatmul.mubr.f32.gmra.mrb[0].mxu0 %v231
    %v1051 = vpop.f32.mrb[0].mxu0
    %v1052 = vadd.f32 %v667, %v1051
    %v1053 = vpop.f32.mrb[0].mxu0
    %1054 = vmatprep.mubr.f32.mxu0 0.0
    %1055 = vmatmul.mubr.f32.gmra.mrb[0].mxu0 %v234
    %v1056 = vpop.f32.mrb[0].mxu0
    %v1057 = vadd.f32 %v672, %v1056
    %v1058 = vpop.f32.mrb[0].mxu0
    %1059 = vdwg.mxu0
    %v1060 = vmax.f32 %v742, 0.0
    %v1061 = vmax.f32 %v747, 0.0
    %v1062 = vmax.f32 %v752, 0.0
    %v1063 = vmax.f32 %v757, 0.0
    %v1064 = vmax.f32 %v762, 0.0
    %v1065 = vmax.f32 %v767, 0.0
    %v1066 = vmax.f32 %v772, 0.0
    %v1067 = vmax.f32 %v777, 0.0
    %v1068 = vmax.f32 %v782, 0.0
    %v1069 = vmax.f32 %v787, 0.0
    %v1070 = vmax.f32 %v792, 0.0
    %v1071 = vmax.f32 %v797, 0.0
    %v1072 = vmax.f32 %v802, 0.0
    %v1073 = vmax.f32 %v807, 0.0
    %v1074 = vmax.f32 %v812, 0.0
    %v1075 = vmax.f32 %v817, 0.0
    %v1076 = vmax.f32 %v822, 0.0
    %v1077 = vmax.f32 %v827, 0.0
    %v1078 = vmax.f32 %v832, 0.0
    %v1079 = vmax.f32 %v837, 0.0
    %v1080 = vmax.f32 %v842, 0.0
    %v1081 = vmax.f32 %v847, 0.0
    %v1082 = vmax.f32 %v852, 0.0
    %v1083 = vmax.f32 %v857, 0.0
    %v1084 = vmax.f32 %v862, 0.0
    %v1085 = vmax.f32 %v867, 0.0
    %v1086 = vmax.f32 %v872, 0.0
    %v1087 = vmax.f32 %v877, 0.0
    %v1088 = vmax.f32 %v882, 0.0
    %v1089 = vmax.f32 %v887, 0.0
    %v1090 = vmax.f32 %v892, 0.0
    %v1091 = vmax.f32 %v897, 0.0
    %v1092 = vmax.f32 %v902, 0.0
    %v1093 = vmax.f32 %v907, 0.0
    %v1094 = vmax.f32 %v912, 0.0
    %v1095 = vmax.f32 %v917, 0.0
    %v1096 = vmax.f32 %v922, 0.0
    %v1097 = vmax.f32 %v927, 0.0
    %v1098 = vmax.f32 %v932, 0.0
    %v1099 = vmax.f32 %v937, 0.0
    %v1100 = vmax.f32 %v942, 0.0
    %v1101 = vmax.f32 %v947, 0.0
    %v1102 = vmax.f32 %v952, 0.0
    %v1103 = vmax.f32 %v957, 0.0
    %v1104 = vmax.f32 %v962, 0.0
    %v1105 = vmax.f32 %v967, 0.0
    %v1106 = vmax.f32 %v972, 0.0
    %v1107 = vmax.f32 %v977, 0.0
    %v1108 = vmax.f32 %v982, 0.0
    %v1109 = vmax.f32 %v987, 0.0
    %v1110 = vmax.f32 %v992, 0.0
    %v1111 = vmax.f32 %v997, 0.0
    %v1112 = vmax.f32 %v1002, 0.0
    %v1113 = vmax.f32 %v1007, 0.0
    %v1114 = vmax.f32 %v1012, 0.0
    %v1115 = vmax.f32 %v1017, 0.0
    %v1116 = vmax.f32 %v1022, 0.0
    %v1117 = vmax.f32 %v1027, 0.0
    %v1118 = vmax.f32 %v1032, 0.0
    %v1119 = vmax.f32 %v1037, 0.0
    %v1120 = vmax.f32 %v1042, 0.0
    %v1121 = vmax.f32 %v1047, 0.0
    %v1122 = vmax.f32 %v1052, 0.0
    %v1123 = vmax.f32 %v1057, 0.0
    %1124 = vst [vmem:[#allocation7] sm:$0xff] %v1060
    %1125 = vst [vmem:[#allocation7 + $0x8] sm:$0xff] %v1061
    %1126 = vst [vmem:[#allocation7 + $0x10] sm:$0xff] %v1062
    %1127 = vst [vmem:[#allocation7 + $0x18] sm:$0xff] %v1063
    %1128 = vst [vmem:[#allocation7 + $0x20] sm:$0xff] %v1064
    %1129 = vst [vmem:[#allocation7 + $0x28] sm:$0xff] %v1065
    %1130 = vst [vmem:[#allocation7 + $0x30] sm:$0xff] %v1066
    %1131 = vst [vmem:[#allocation7 + $0x38] sm:$0xff] %v1067
    %1132 = vst [vmem:[#allocation7 + $0x40] sm:$0xff] %v1068
    %1133 = vst [vmem:[#allocation7 + $0x48] sm:$0xff] %v1069
    %1134 = vst [vmem:[#allocation7 + $0x50] sm:$0xff] %v1070
    %1135 = vst [vmem:[#allocation7 + $0x58] sm:$0xff] %v1071
    %1136 = vst [vmem:[#allocation7 + $0x60] sm:$0xff] %v1072
    %1137 = vst [vmem:[#allocation7 + $0x68] sm:$0xff] %v1073
    %1138 = vst [vmem:[#allocation7 + $0x70] sm:$0xff] %v1074
    %1139 = vst [vmem:[#allocation7 + $0x78] sm:$0xff] %v1075
    %1140 = vst [vmem:[#allocation7 + $0x80] sm:$0xff] %v1076
    %1141 = vst [vmem:[#allocation7 + $0x88] sm:$0xff] %v1077
    %1142 = vst [vmem:[#allocation7 + $0x90] sm:$0xff] %v1078
    %1143 = vst [vmem:[#allocation7 + $0x98] sm:$0xff] %v1079
    %1144 = vst [vmem:[#allocation7 + $0xa0] sm:$0xff] %v1080
    %1145 = vst [vmem:[#allocation7 + $0xa8] sm:$0xff] %v1081
    %1146 = vst [vmem:[#allocation7 + $0xb0] sm:$0xff] %v1082
    %1147 = vst [vmem:[#allocation7 + $0xb8] sm:$0xff] %v1083
    %1148 = vst [vmem:[#allocation7 + $0xc0] sm:$0xff] %v1084
    %1149 = vst [vmem:[#allocation7 + $0xc8] sm:$0xff] %v1085
    %1150 = vst [vmem:[#allocation7 + $0xd0] sm:$0xff] %v1086
    %1151 = vst [vmem:[#allocation7 + $0xd8] sm:$0xff] %v1087
    %1152 = vst [vmem:[#allocation7 + $0xe0] sm:$0xff] %v1088
    %1153 = vst [vmem:[#allocation7 + $0xe8] sm:$0xff] %v1089
    %1154 = vst [vmem:[#allocation7 + $0xf0] sm:$0xff] %v1090
    %1155 = vst [vmem:[#allocation7 + $0xf8] sm:$0xff] %v1091
    %1156 = vst [vmem:[#allocation7 + $0x100] sm:$0xff] %v1092
    %1157 = vst [vmem:[#allocation7 + $0x108] sm:$0xff] %v1093
    %1158 = vst [vmem:[#allocation7 + $0x110] sm:$0xff] %v1094
    %1159 = vst [vmem:[#allocation7 + $0x118] sm:$0xff] %v1095
    %1160 = vst [vmem:[#allocation7 + $0x120] sm:$0xff] %v1096
    %1161 = vst [vmem:[#allocation7 + $0x128] sm:$0xff] %v1097
    %1162 = vst [vmem:[#allocation7 + $0x130] sm:$0xff] %v1098
    %1163 = vst [vmem:[#allocation7 + $0x138] sm:$0xff] %v1099
    %1164 = vst [vmem:[#allocation7 + $0x140] sm:$0xff] %v1100
    %1165 = vst [vmem:[#allocation7 + $0x148] sm:$0xff] %v1101
    %1166 = vst [vmem:[#allocation7 + $0x150] sm:$0xff] %v1102
    %1167 = vst [vmem:[#allocation7 + $0x158] sm:$0xff] %v1103
    %1168 = vst [vmem:[#allocation7 + $0x160] sm:$0xff] %v1104
    %1169 = vst [vmem:[#allocation7 + $0x168] sm:$0xff] %v1105
    %1170 = vst [vmem:[#allocation7 + $0x170] sm:$0xff] %v1106
    %1171 = vst [vmem:[#allocation7 + $0x178] sm:$0xff] %v1107
    %1172 = vst [vmem:[#allocation7 + $0x180] sm:$0xff] %v1108
    %1173 = vst [vmem:[#allocation7 + $0x188] sm:$0xff] %v1109
    %1174 = vst [vmem:[#allocation7 + $0x190] sm:$0xff] %v1110
    %1175 = vst [vmem:[#allocation7 + $0x198] sm:$0xff] %v1111
    %1176 = vst [vmem:[#allocation7 + $0x1a0] sm:$0xff] %v1112
    %1177 = vst [vmem:[#allocation7 + $0x1a8] sm:$0xff] %v1113
    %1178 = vst [vmem:[#allocation7 + $0x1b0] sm:$0xff] %v1114
    %1179 = vst [vmem:[#allocation7 + $0x1b8] sm:$0xff] %v1115
    %1180 = vst [vmem:[#allocation7 + $0x1c0] sm:$0xff] %v1116
    %1181 = vst [vmem:[#allocation7 + $0x1c8] sm:$0xff] %v1117
    %1182 = vst [vmem:[#allocation7 + $0x1d0] sm:$0xff] %v1118
    %1183 = vst [vmem:[#allocation7 + $0x1d8] sm:$0xff] %v1119
    %1184 = vst [vmem:[#allocation7 + $0x1e0] sm:$0xff] %v1120
    %1185 = vst [vmem:[#allocation7 + $0x1e8] sm:$0xff] %v1121
    %1186 = vst [vmem:[#allocation7 + $0x1f0] sm:$0xff] %v1122
    %1187 = vst [vmem:[#allocation7 + $0x1f8] sm:$0xff] %v1123
    // Predicated region
    $region22: #{tpu_custom_call.1} parent=1 // pred_check
      _
    $region23: #{tpu_custom_call.1} parent=1 // pred_check_branch
      %1189 = sbr.rel (0) target = $region25
    $region24: #{tpu_custom_call.1} parent=1 // pred_region
      %s1191 = ssub.s32 8192, 8192
      %1192 = vsyncadd [#allocation4], %s1191
      %s1193 = sshll.u32 [#allocation7], 4
      %s1194 = int_to_ptr.vmem [resolvable:$true] %s1193
      %1199 = dma.vmem_to_hbm [thread:$0]  %s1194, 8192, %s3, [#allocation4], 128, 128, 8
    $region25: #{tpu_custom_call.1} parent=1 // pred_fallthru
      _
    // Predicated region
    $region26: #{tpu_custom_call.1} parent=1 // pred_check
      _
    $region27: #{tpu_custom_call.1} parent=1 // pred_check_branch
      %1201 = sbr.rel (0) target = $region29
    $region28: #{tpu_custom_call.1} parent=1 // pred_region
      %1202 = dma.done [#allocation4], 8192
    $region29: #{tpu_custom_call.1} parent=1 // pred_fallthru
      _
    %1203 = vsyncpa [#allocation3], 1
    %1204 = vsyncpa [#allocation6], 1
    %1205 = vsyncpa [#allocation4], 1

</llo_original>
